<compile_context>
chip_gen: v5e
topology: v5e:2x2
jax: 0.10.0
libtpu: 0.0.40
codegen_flags: <defaults>
</compile_context>

<pallas_src>
import math
import functools

import numpy as np
import jax
import jax.numpy as jnp
from jax.experimental import pallas as pl
from jax.experimental.pallas import tpu as pltpu


def _round_up(x, m):
    return (x + m - 1) // m * m


# ----------------------------- linear projection ----------------------------

def _linear_kernel(x_ref, w_ref, b_ref, o_ref):
    acc = jnp.dot(x_ref[...], w_ref[...], preferred_element_type=jnp.float32)
    o_ref[...] = (acc + b_ref[...]).astype(o_ref.dtype)


def pallas_linear(x, w, b, *, row_tile=512, compute_dtype=jnp.bfloat16,
                  out_dtype=jnp.float32):
    """x:(R,Cin) @ w:(Cin,Cout) + b:(Cout,) -> (R,Cout).

    Row-tiled ("parallel" row axis), bf16 operand streaming, f32 accumulation.
    Cout is internally padded to a multiple of 128 so output stores are
    lane-dense (no-op for the standard d_model=256 / 384 configs)."""
    R, Cin = x.shape
    Cout = w.shape[1]
    Cout_p = _round_up(Cout, 128)
    if Cout_p != Cout:
        w = jnp.pad(w, ((0, 0), (0, Cout_p - Cout)))
        b = jnp.pad(b, (0, Cout_p - Cout))
    tr = min(row_tile, _round_up(R, 8))
    Rp = _round_up(R, tr)
    xp = x if Rp == R else jnp.pad(x, ((0, Rp - R), (0, 0)))

    out = pl.pallas_call(
        _linear_kernel,
        out_shape=jax.ShapeDtypeStruct((Rp, Cout_p), out_dtype),
        grid=(Rp // tr,),
        in_specs=[
            pl.BlockSpec((tr, Cin), lambda i: (i, 0)),
            pl.BlockSpec((Cin, Cout_p), lambda i: (0, 0)),
            pl.BlockSpec((1, Cout_p), lambda i: (0, 0)),
        ],
        out_specs=pl.BlockSpec((tr, Cout_p), lambda i: (i, 0)),
        compiler_params=pltpu.CompilerParams(
            dimension_semantics=("parallel",)),
    )(xp.astype(compute_dtype), w.astype(compute_dtype),
      b.reshape(1, Cout_p).astype(jnp.float32))
    if Rp != R or Cout_p != Cout:
        out = out[:R, :Cout]
    return out


# --------------------------- deformable-attn core ----------------------------

def _deform_core_kernel(lvl_ref, cx_ref, cy_ref, px_ref, py_ref, attn_ref,
                        value_ref, out_ref, acc_ref, *, n_heads, n_points,
                        head_dim):
    del lvl_ref  # level selection already applied by the BlockSpec index maps
    t = pl.program_id(2)                      # Len (reduction) tile index

    @pl.when(t == 0)
    def _():
        acc_ref[...] = jnp.zeros_like(acc_ref)

    cx = cx_ref[...]                          # (1, TLen)  local pixel x
    cy = cy_ref[...]                          # (1, TLen)  local pixel y
    v = value_ref[0]                          # (TLen, C)  bf16
    px = px_ref[0, 0]                         # (TQ, M*P)  this tile's level
    py = py_ref[0, 0]                         # (TQ, M*P)
    attn = attn_ref[0, 0]                     # (TQ, M*P)  softmaxed weights

    head_outs = []
    for m in range(n_heads):
        w_sum = None
        for p in range(n_points):
            k = m * n_points + p
            qx = px[:, k:k + 1]                                   # (TQ, 1)
            qy = py[:, k:k + 1]
            a = attn[:, k:k + 1]
            # separable bilinear "tent"; attn (>=0) folded into the y factor
            wx = jnp.maximum(1.0 - jnp.abs(cx - qx), 0.0)         # (TQ, TLen)
            wy = jnp.maximum(a - a * jnp.abs(cy - qy), 0.0)
            w = wx * wy
            w_sum = w if w_sum is None else w_sum + w             # running sum
        samp = w_sum.astype(v.dtype)                              # bf16 -> MXU
        head_outs.append(
            jnp.dot(samp, v[:, m * head_dim:(m + 1) * head_dim],
                    preferred_element_type=jnp.float32))          # (TQ, Dh)

    acc_ref[...] += jnp.concatenate(head_outs, axis=-1)           # (TQ, C)

    @pl.when(t == pl.num_programs(2) - 1)
    def _():
        out_ref[0] = acc_ref[...].astype(out_ref.dtype)


def pallas_deform_core(lvl_ids, cx, cy, px, py, attn, value, *, n_heads,
                       n_points, q_tile, len_tile, out_dtype=jnp.bfloat16):
    """value:(N,Len_pad,C) bf16; cx/cy:(1,Len_pad); px/py/attn:
    (N,L,Lq_pad,M*P); lvl_ids:(Len_pad//len_tile,) int32 -> (N,Lq_pad,C)."""
    N, Len_pad, C = value.shape
    Lq_pad = px.shape[2]
    MP = n_heads * n_points
    Dh = C // n_heads
    kernel = functools.partial(_deform_core_kernel, n_heads=n_heads,
                               n_points=n_points, head_dim=Dh)
    grid = (N, Lq_pad // q_tile, Len_pad // len_tile)
    return pl.pallas_call(
        kernel,
        out_shape=jax.ShapeDtypeStruct((N, Lq_pad, C), out_dtype),
        grid_spec=pltpu.PrefetchScalarGridSpec(
            num_scalar_prefetch=1,
            grid=grid,
            in_specs=[
                pl.BlockSpec((1, len_tile), lambda n, q, t, lvl: (0, t)),   # cx
                pl.BlockSpec((1, len_tile), lambda n, q, t, lvl: (0, t)),   # cy
                pl.BlockSpec((1, 1, q_tile, MP),
                             lambda n, q, t, lvl: (n, lvl[t], q, 0)),       # px
                pl.BlockSpec((1, 1, q_tile, MP),
                             lambda n, q, t, lvl: (n, lvl[t], q, 0)),       # py
                pl.BlockSpec((1, 1, q_tile, MP),
                             lambda n, q, t, lvl: (n, lvl[t], q, 0)),       # attn
                pl.BlockSpec((1, len_tile, C),
                             lambda n, q, t, lvl: (n, t, 0)),               # value
            ],
            out_specs=pl.BlockSpec((1, q_tile, C),
                                   lambda n, q, t, lvl: (n, q, 0)),
            scratch_shapes=[pltpu.VMEM((q_tile, C), jnp.float32)],
        ),
        compiler_params=pltpu.CompilerParams(
            dimension_semantics=("parallel", "parallel", "arbitrary")),
    )(lvl_ids, cx, cy, px, py, attn, value)


# --------------------------------- parameters --------------------------------

def init_params(key, d_model, n_heads, n_levels, n_points):
    """Deterministic re-implementation of MSDeformAttn._reset_parameters."""
    C = d_model
    out_so = n_heads * n_levels * n_points * 2
    out_aw = n_heads * n_levels * n_points
    k1, k2 = jax.random.split(key)

    def xavier(k, fan_out, fan_in):
        a = math.sqrt(6.0 / (fan_in + fan_out))
        # stored transposed as (fan_in, fan_out) for x @ W
        return jax.random.uniform(k, (fan_in, fan_out), jnp.float32, -a, a)

    thetas = jnp.arange(n_heads, dtype=jnp.float32) * (2.0 * math.pi / n_heads)
    grid_init = jnp.stack([jnp.cos(thetas), jnp.sin(thetas)], -1)     # (M, 2)
    grid_init = grid_init / jnp.max(jnp.abs(grid_init), -1, keepdims=True)
    grid_init = jnp.tile(grid_init.reshape(n_heads, 1, 1, 2),
                         (1, n_levels, n_points, 1))
    scale = jnp.arange(1, n_points + 1,
                       dtype=jnp.float32).reshape(1, 1, n_points, 1)
    grid_init = grid_init * scale

    return {
        "sampling_offsets_w": jnp.zeros((C, out_so), jnp.float32),
        "sampling_offsets_b": grid_init.reshape(-1),
        "attention_weights_w": jnp.zeros((C, out_aw), jnp.float32),
        "attention_weights_b": jnp.zeros((out_aw,), jnp.float32),
        "value_proj_w": xavier(k1, C, C),
        "value_proj_b": jnp.zeros((C,), jnp.float32),
        "output_proj_w": xavier(k2, C, C),
        "output_proj_b": jnp.zeros((C,), jnp.float32),
    }


# ------------------------------- module wrapper -------------------------------

def ms_deform_attn_forward(params, query, reference_points, input_flatten,
                           input_spatial_shapes, input_level_start_index,
                           input_padding_mask=None, *, n_heads, n_levels,
                           n_points, q_tile=128, compute_dtype=jnp.bfloat16):
    """Forward pass of MSDeformAttn.  `input_spatial_shapes` must be concrete
    (level geometry is compile-time static on TPU)."""
    del input_level_start_index  # recomputed from the static spatial shapes
    N, Lq, C = query.shape
    _, Len_in, _ = input_flatten.shape
    M, L, P = n_heads, n_levels, n_points

    shapes = [(int(h), int(w)) for h, w in np.asarray(input_spatial_shapes)]
    assert len(shapes) == L
    level_sizes = [h * w for h, w in shapes]
    assert sum(level_sizes) == Len_in

    # ---- value projection (bf16 in / bf16 out) + optional padding mask ----
    value = pallas_linear(input_flatten.reshape(N * Len_in, C),
                          params["value_proj_w"], params["value_proj_b"],
                          compute_dtype=compute_dtype,
                          out_dtype=compute_dtype).reshape(N, Len_in, C)
    if input_padding_mask is not None:
        value = jnp.where(input_padding_mask[..., None],
                          jnp.asarray(0.0, value.dtype), value)

    # ---- fused sampling-offset + attention-weight projection ----
    out_so = M * L * P * 2
    out_aw = M * L * P
    w_cat = jnp.concatenate([params["sampling_offsets_w"],
                             params["attention_weights_w"]], axis=1)
    b_cat = jnp.concatenate([params["sampling_offsets_b"],
                             params["attention_weights_b"]], axis=0)
    qproj = pallas_linear(query.reshape(N * Lq, C), w_cat, b_cat,
                          compute_dtype=compute_dtype, out_dtype=jnp.float32)
    so = qproj[:, :out_so].reshape(N, Lq, M, L, P, 2)
    logits = qproj[:, out_so:out_so + out_aw].reshape(N, Lq, M, L * P)

    # softmax hoisted out of the kernel's reduction loop
    attn = jax.nn.softmax(logits, axis=-1).reshape(N, Lq, M, L, P)

    # ---- sampling locations -> per-level pixel coordinates (JAX glue) ----
    Hs = jnp.array([h for h, _ in shapes], jnp.float32)
    Ws = jnp.array([w for _, w in shapes], jnp.float32)
    if reference_points.shape[-1] == 2:
        offset_normalizer = jnp.stack([Ws, Hs], -1)                 # (L,2)=(x,y)
        loc = (reference_points[:, :, None, :, None, :]
               + so / offset_normalizer[None, None, None, :, None, :])
    elif reference_points.shape[-1] == 4:
        loc = (reference_points[:, :, None, :, None, :2]
               + so / P * reference_points[:, :, None, :, None, 2:] * 0.5)
    else:
        raise ValueError("Last dim of reference_points must be 2 or 4.")

    # grid_sample(align_corners=False, padding_mode='zeros'): pixel = loc*size-0.5
    px = loc[..., 0] * Ws[None, None, None, :, None] - 0.5          # (N,Lq,M,L,P)
    py = loc[..., 1] * Hs[None, None, None, :, None] - 0.5
    # clamping is value-preserving (anything past the border is zero-weight)
    px = jnp.clip(px, -2.0, Ws[None, None, None, :, None] + 1.0)
    py = jnp.clip(py, -2.0, Hs[None, None, None, :, None] + 1.0)

    # ---- level-aligned tiling ----
    q_tile = min(q_tile, _round_up(Lq, 8))
    Lq_pad = _round_up(Lq, q_tile)
    len_tile = 512 if max(level_sizes) > 512 else 128
    padded_sizes = [_round_up(s, len_tile) for s in level_sizes]
    Len_pad = sum(padded_sizes)

    # tile -> level table (scalar-prefetched into SMEM)
    lvl_ids = jnp.asarray(np.concatenate(
        [np.full(ps // len_tile, l, np.int32)
         for l, ps in enumerate(padded_sizes)]))

    # level-aligned value (each level padded to a multiple of len_tile)
    parts, start = [], 0
    for sz, ps in zip(level_sizes, padded_sizes):
        part = value[:, start:start + sz, :]
        if ps != sz:
            part = jnp.pad(part, ((0, 0), (0, ps - sz), (0, 0)))
        parts.append(part)
        start += sz
    value_p = jnp.concatenate(parts, axis=1) if len(parts) > 1 else parts[0]

    # per-column local (x, y) pixel coordinates; padding columns get -4
    # (>=2 away from any clipped sample point -> always zero tent weight)
    cx_np = np.full(Len_pad, -4.0, np.float32)
    cy_np = np.full(Len_pad, -4.0, np.float32)
    off = 0
    for (h, w), sz, ps in zip(shapes, level_sizes, padded_sizes):
        idx = np.arange(sz)
        cx_np[off:off + sz] = (idx % w).astype(np.float32)
        cy_np[off:off + sz] = (idx // w).astype(np.float32)
        off += ps
    cx = jnp.asarray(cx_np).reshape(1, Len_pad)
    cy = jnp.asarray(cy_np).reshape(1, Len_pad)

    # (N, Lq, M, L, P) -> (N, L, Lq_pad, M*P): level leads so the BlockSpec
    # can select exactly the current tile's level via the prefetched table.
    def to_core_layout(a):
        a = jnp.transpose(a, (0, 3, 1, 2, 4)).reshape(N, L, Lq, M * P)
        if Lq_pad != Lq:
            a = jnp.pad(a, ((0, 0), (0, 0), (0, Lq_pad - Lq), (0, 0)))
        return a.astype(jnp.float32)

    core = pallas_deform_core(lvl_ids, cx, cy,
                              to_core_layout(px), to_core_layout(py),
                              to_core_layout(attn), value_p,
                              n_heads=M, n_points=P,
                              q_tile=q_tile, len_tile=len_tile,
                              out_dtype=compute_dtype)[:, :Lq, :]

    out = pallas_linear(core.reshape(N * Lq, C),
                        params["output_proj_w"], params["output_proj_b"],
                        compute_dtype=compute_dtype, out_dtype=jnp.float32)
    return out.reshape(N, Lq, C)


# ------------------------------ pure-JAX reference ----------------------------

def ref_forward(params, query, reference_points, input_flatten,
                spatial_shapes_list, n_heads, n_levels, n_points):
    N, Lq, C = query.shape
    _, Len_in, _ = input_flatten.shape
    M, L, P = n_heads, n_levels, n_points
    Dh = C // M
    dot = lambda a, b: jnp.dot(a, b, precision=jax.lax.Precision.HIGHEST)

    value = dot(input_flatten, params["value_proj_w"]) + params["value_proj_b"]
    value_t = value.reshape(N, Len_in, M, Dh).transpose(0, 2, 1, 3)
    so = (dot(query, params["sampling_offsets_w"])
          + params["sampling_offsets_b"]).reshape(N, Lq, M, L, P, 2)
    aw = (dot(query, params["attention_weights_w"])
          + params["attention_weights_b"]).reshape(N, Lq, M, L * P)
    attn = jax.nn.softmax(aw, -1).reshape(N, Lq, M, L, P)

    spatial_shapes = jnp.array(spatial_shapes_list, jnp.int32)
    offset_normalizer = jnp.stack(
        [spatial_shapes[:, 1], spatial_shapes[:, 0]], -1).astype(jnp.float32)
    loc = (reference_points[:, :, None, :, None, :]
           + so / offset_normalizer[None, None, None, :, None, :])

    out = jnp.zeros((N, Lq, M, Dh), jnp.float32)
    start = 0
    for l, (H, W) in enumerate(spatial_shapes_list):
        for p in range(P):
            x = loc[:, :, :, l, p, 0] * W - 0.5
            y = loc[:, :, :, l, p, 1] * H - 0.5
            x0 = jnp.floor(x)
            y0 = jnp.floor(y)
            lx, ly = x - x0, y - y0
            hx, hy = 1.0 - lx, 1.0 - ly
            x0i, y0i = x0.astype(jnp.int32), y0.astype(jnp.int32)
            a = attn[:, :, :, l, p]
            for yi, xi, bw in ((y0i, x0i, hy * hx), (y0i, x0i + 1, hy * lx),
                               (y0i + 1, x0i, ly * hx),
                               (y0i + 1, x0i + 1, ly * lx)):
                valid = ((xi >= 0) & (xi < W) & (yi >= 0)
                         & (yi < H)).astype(jnp.float32)
                idx = start + jnp.clip(yi, 0, H - 1) * W + jnp.clip(xi, 0, W - 1)
                idx_t = idx.transpose(0, 2, 1)            # (N, M, Lq)
                g = jnp.take_along_axis(value_t, idx_t[..., None], axis=2)
                g = g.transpose(0, 2, 1, 3)               # (N, Lq, M, Dh)
                out = out + (a * bw * valid)[..., None] * g
        start += H * W

    out = out.reshape(N, Lq, C)
    return dot(out, params["output_proj_w"]) + params["output_proj_b"]


# ------------------------------------- main -----------------------------------

if __name__ == "__main__":
    d_model, n_heads, n_levels, n_points = 32, 4, 2, 2
    spatial_shapes_list = [(8, 8), (4, 4)]
    N, Lq = 2, 8
    Len_in = sum(h * w for h, w in spatial_shapes_list)

    key = jax.random.PRNGKey(0)
    kp, kq, kf, kr = jax.random.split(key, 4)
    params = init_params(kp, d_model, n_heads, n_levels, n_points)

    query = jax.random.normal(kq, (N, Lq, d_model), jnp.float32)
    input_flatten = jax.random.normal(kf, (N, Len_in, d_model), jnp.float32)
    reference_points = jax.random.uniform(kr, (N, Lq, n_levels, 2), jnp.float32)

    spatial_shapes = jnp.array(spatial_shapes_list, jnp.int32)
    level_sizes = spatial_shapes[:, 0] * spatial_shapes[:, 1]
    level_start_index = jnp.concatenate(
        [jnp.zeros((1,), jnp.int32),
         jnp.cumsum(level_sizes)[:-1].astype(jnp.int32)])

    out = ms_deform_attn_forward(
        params, query, reference_points, input_flatten,
        spatial_shapes, level_start_index, None,
        n_heads=n_heads, n_levels=n_levels, n_points=n_points)
    out = jax.block_until_ready(out)

    ref = ref_forward(params, query, reference_points, input_flatten,
                      spatial_shapes_list, n_heads, n_levels, n_points)

    assert out.shape == (N, Lq, d_model)
    assert bool(jnp.all(jnp.isfinite(out)))
    max_err = float(jnp.max(jnp.abs(out - ref)))
    assert max_err < 5e-2, f"max abs err {max_err}"
    print("KERNEL_OK")
</pallas_src>

<mosaic_0001>
module attributes {stable_mosaic.version = 11 : i64} {
  func.func @_linear_kernel(%arg0: i32, %arg1: memref<160x32xbf16, #tpu.memory_space<vmem>>, %arg2: memref<32x128xbf16, #tpu.memory_space<vmem>>, %arg3: memref<1x128xf32, #tpu.memory_space<vmem>>, %arg4: memref<160x128xbf16, #tpu.memory_space<vmem>>) attributes {dimension_semantics = [#tpu.dimension_semantics<parallel>], iteration_bounds = array<i64: 1>, scalar_prefetch = 0 : i64, scratch_operands = 0 : i64, tpu.core_type = #tpu.core_type<tc>, window_params = [{transform_indices = @transform_0, window_bounds = array<i64: 160, 32>}, {pipeline_mode = #tpu.pipeline_mode<synchronous>, transform_indices = @transform_1, window_bounds = array<i64: 32, 128>}, {pipeline_mode = #tpu.pipeline_mode<synchronous>, transform_indices = @transform_2, window_bounds = array<i64: 1, 128>}, {transform_indices = @transform_3, window_bounds = array<i64: 160, 128>}]} {
    %c0 = arith.constant 0 : index
    %c0_0 = arith.constant 0 : index
    %0 = vector.load %arg1[%c0, %c0_0] : memref<160x32xbf16, #tpu.memory_space<vmem>>, vector<160x32xbf16>
    %c0_1 = arith.constant 0 : index
    %c0_2 = arith.constant 0 : index
    %1 = vector.load %arg2[%c0_1, %c0_2] : memref<32x128xbf16, #tpu.memory_space<vmem>>, vector<32x128xbf16>
    %cst = arith.constant dense<0.000000e+00> : vector<160x128xf32>
    %2 = tpu.matmul %0, %1, %cst {dimension_numbers = #tpu.dot_dimension_numbers<[1], [0], [0], [1], [0, 0, 1, 1], [], []>} : vector<160x32xbf16>, vector<32x128xbf16>, vector<160x128xf32> -> vector<160x128xf32>
    %c0_3 = arith.constant 0 : index
    %c0_4 = arith.constant 0 : index
    %3 = vector.load %arg3[%c0_3, %c0_4] : memref<1x128xf32, #tpu.memory_space<vmem>>, vector<1x128xf32>
    %4 = vector.broadcast %3 : vector<1x128xf32> to vector<160x128xf32>
    %5 = arith.addf %2, %4 : vector<160x128xf32>
    %6 = arith.truncf %5 : vector<160x128xf32> to vector<160x128xbf16>
    %c0_5 = arith.constant 0 : index
    %c0_6 = arith.constant 0 : index
    %7 = vector.load %arg4[%c0_5, %c0_6] : memref<160x128xbf16, #tpu.memory_space<vmem>>, vector<160x128xbf16>
    tpu.vector_store %arg4[%c0_5, %c0_6], %6 {strides = array<i32>} : memref<160x128xbf16, #tpu.memory_space<vmem>>, vector<160x128xbf16>,
    return
  }
  func.func @transform_0(%arg0: i32) -> (i32, i32) {
    %c0_i32 = arith.constant 0 : i32
    %c0_i32_0 = arith.constant 0 : i32
    return %arg0, %c0_i32 : i32, i32
  }
  func.func @transform_1(%arg0: i32) -> (i32, i32) {
    %c0_i32 = arith.constant 0 : i32
    %c0_i32_0 = arith.constant 0 : i32
    %c0_i32_1 = arith.constant 0 : i32
    return %c0_i32, %c0_i32_0 : i32, i32
  }
  func.func @transform_2(%arg0: i32) -> (i32, i32) {
    %c0_i32 = arith.constant 0 : i32
    %c0_i32_0 = arith.constant 0 : i32
    %c0_i32_1 = arith.constant 0 : i32
    return %c0_i32, %c0_i32_0 : i32, i32
  }
  func.func @transform_3(%arg0: i32) -> (i32, i32) {
    %c0_i32 = arith.constant 0 : i32
    %c0_i32_0 = arith.constant 0 : i32
    return %arg0, %c0_i32 : i32, i32
  }
}

</mosaic_0001>

<llo_original>
// kernel: tpu_custom_call.1
$region0: #{tpu_custom_call.1}
  #allocation0 [shape = 'u32[]', space=smem, size = 0x4, offset = 0x4, fixed_abs, tag = 'smem constant byte address 0x4 - core index']
  #allocation1 [shape = 'u32[72,128]{1,0:T(1,128)}', space=vmem, size = 0x9000, scoped, tag = 'internal scratch']
  %s0 = inlined_call_operand.vmem [shape: bf16[160,32], index: 0, kind: input, shape index: {}]
  %s1 = inlined_call_operand.vmem [shape: bf16[32,128], index: 1, kind: input, shape index: {}]
  %s2 = inlined_call_operand.vmem [shape: f32[1,128], index: 2, kind: input, shape index: {}]
  %s3 = inlined_call_operand.hbm [shape: bf16[160,128], index: 3, kind: output, shape index: {}]
  %s4 = sld [smem:[#allocation0]]
  $region22: #{tpu_custom_call.1} parent=0
    _
  %s6 = ssub.s32 1, %s4
  %s7 = scalar_select 0, %s6, %s4
  $region1: #{tpu_custom_call.1} parent=0
    #allocation2 [shape = 'u8[40960]{0}', space=vmem, size = 0xa000, scoped, tag = 'output window, operand 0, single buffered']
    #allocation3 [shape = 's32[1]{0}', space=sflag, size = 0x4, scoped, tag = 'scoped memory for tpu_custom_call.1']
    %8 = vsyncpa [#allocation3], 0
    // Predicated region
    $region2: #{tpu_custom_call.1} parent=1 // pred_check
      _
    $region3: #{tpu_custom_call.1} parent=1 // pred_check_branch
      %10 = sbr.rel (0) target = $region5
    $region4: #{tpu_custom_call.1} parent=1 // pred_region
      _
    $region5: #{tpu_custom_call.1} parent=1 // pred_fallthru
      _
    // Predicated region
    $region6: #{tpu_custom_call.1} parent=1 // pred_check
      _
    $region7: #{tpu_custom_call.1} parent=1 // pred_check_branch
      %12 = sbr.rel (0) target = $region9
    $region8: #{tpu_custom_call.1} parent=1 // pred_region
      _
    $region9: #{tpu_custom_call.1} parent=1 // pred_fallthru
      _
    // Predicated region
    $region10: #{tpu_custom_call.1} parent=1 // pred_check
      _
    $region11: #{tpu_custom_call.1} parent=1 // pred_check_branch
      %14 = sbr.rel (0) target = $region13
    $region12: #{tpu_custom_call.1} parent=1 // pred_region
      _
    $region13: #{tpu_custom_call.1} parent=1 // pred_fallthru
      _
    %v16 = vld [vmem:[%s0] sm:$0xf]
    %v17 = vld [vmem:[%s0 + $0x4] sm:$0xf]
    %v18 = vld [vmem:[%s0 + $0x8] sm:$0xf]
    %v19 = vld [vmem:[%s0 + $0xc] sm:$0xf]
    %v20 = vld [vmem:[%s0 + $0x10] sm:$0xf]
    %v21 = vld [vmem:[%s0 + $0x14] sm:$0xf]
    %v22 = vld [vmem:[%s0 + $0x18] sm:$0xf]
    %v23 = vld [vmem:[%s0 + $0x1c] sm:$0xf]
    %v24 = vld [vmem:[%s0 + $0x20] sm:$0xf]
    %v25 = vld [vmem:[%s0 + $0x24] sm:$0xf]
    %v26 = vld [vmem:[%s0 + $0x28] sm:$0xf]
    %v27 = vld [vmem:[%s0 + $0x2c] sm:$0xf]
    %v28 = vld [vmem:[%s0 + $0x30] sm:$0xf]
    %v29 = vld [vmem:[%s0 + $0x34] sm:$0xf]
    %v30 = vld [vmem:[%s0 + $0x38] sm:$0xf]
    %v31 = vld [vmem:[%s0 + $0x3c] sm:$0xf]
    %v32 = vld [vmem:[%s0 + $0x40] sm:$0xf]
    %v33 = vld [vmem:[%s0 + $0x44] sm:$0xf]
    %v34 = vld [vmem:[%s0 + $0x48] sm:$0xf]
    %v35 = vld [vmem:[%s0 + $0x4c] sm:$0xf]
    %v36 = vld [vmem:[%s1] sm:$0xf]
    %v37 = vld [vmem:[%s1 + $0x4] sm:$0xf]
    %v38 = vld [vmem:[%s1 + $0x8] sm:$0xf]
    %v39 = vld [vmem:[%s1 + $0xc] sm:$0xf]
    %v40 = vld [vmem:[%s2] sm:$0x1]
    %v42 = vperm.slane %v40, 0
    %v64 = vunpack.c.l.b16 %v16
    %v65 = vunpack.c.l.b16 %v17
    %v66 = vunpack.c.l.b16 %v18
    %v67 = vunpack.c.l.b16 %v19
    %v68 = vunpack.c.l.b16 %v20
    %v69 = vunpack.c.l.b16 %v21
    %v70 = vunpack.c.l.b16 %v22
    %v71 = vunpack.c.l.b16 %v23
    %v72 = vunpack.c.l.b16 %v24
    %v73 = vunpack.c.l.b16 %v25
    %v74 = vunpack.c.l.b16 %v26
    %v75 = vunpack.c.l.b16 %v27
    %v76 = vunpack.c.l.b16 %v28
    %v77 = vunpack.c.l.b16 %v29
    %v78 = vunpack.c.l.b16 %v30
    %v79 = vunpack.c.l.b16 %v31
    %v80 = vunpack.c.l.b16 %v32
    %v81 = vunpack.c.l.b16 %v33
    %v82 = vunpack.c.l.b16 %v34
    %v83 = vunpack.c.l.b16 %v35
    %v84 = vpack.c.b16 %v65, %v64
    %v85 = vpack.c.b16 %v67, %v66
    %v86 = vpack.c.b16 %v69, %v68
    %v87 = vpack.c.b16 %v71, %v70
    %v88 = vpack.c.b16 %v73, %v72
    %v89 = vpack.c.b16 %v75, %v74
    %v90 = vpack.c.b16 %v77, %v76
    %v91 = vpack.c.b16 %v79, %v78
    %v92 = vpack.c.b16 %v81, %v80
    %v93 = vpack.c.b16 %v83, %v82
    %v98 = vunpack.c.l.b16 %v36
    %v99 = vunpack.c.l.b16 %v37
    %v100 = vunpack.c.l.b16 %v38
    %v101 = vunpack.c.l.b16 %v39
    %v102 = vpack.c.b16 %v99, %v98
    %v103 = vpack.c.b16 %v101, %v100
    %vm106 = vcmask 261120
    %v108 = vsel %vm106, %v84, 0
    %v111 = vsel %vm106, %v85, 0
    %v114 = vsel %vm106, %v86, 0
    %v117 = vsel %vm106, %v87, 0
    %v120 = vsel %vm106, %v88, 0
    %v123 = vsel %vm106, %v89, 0
    %v126 = vsel %vm106, %v90, 0
    %v129 = vsel %vm106, %v91, 0
    %v132 = vsel %vm106, %v92, 0
    %v135 = vsel %vm106, %v93, 0
    %137 = vmatpush.bf16.msra.mxu0 0
    %138 = vmatpush.bf16.msra.mxu0 0
    %139 = vmatpush.bf16.msra.mxu0 0
    %140 = vmatpush.bf16.msra.mxu0 0
    %141 = vmatpush.bf16.msra.mxu0 0
    %142 = vmatpush.bf16.msra.mxu0 0
    %143 = vmatpush.bf16.msra.mxu0 %v103
    %144 = vmatpush.bf16.msra.mxu0 %v102
    %145 = vmatmul.bf16.gmra.mxu0 %v108
    %v146 = vpop.f32.mrf.mxu0
    %v147 = vadd.f32 %v42, %v146
    %v148 = vpop.f32.mrf.mxu0
    %v149 = vadd.f32 %v42, %v148
    %150 = vmatmul.bf16.gmra.mxu0 %v111
    %v151 = vpop.f32.mrf.mxu0
    %v152 = vadd.f32 %v42, %v151
    %v153 = vpop.f32.mrf.mxu0
    %v154 = vadd.f32 %v42, %v153
    %155 = vmatmul.bf16.gmra.mxu0 %v114
    %v156 = vpop.f32.mrf.mxu0
    %v157 = vadd.f32 %v42, %v156
    %v158 = vpop.f32.mrf.mxu0
    %v159 = vadd.f32 %v42, %v158
    %160 = vmatmul.bf16.gmra.mxu0 %v117
    %v161 = vpop.f32.mrf.mxu0
    %v162 = vadd.f32 %v42, %v161
    %v163 = vpop.f32.mrf.mxu0
    %v164 = vadd.f32 %v42, %v163
    %165 = vmatmul.bf16.gmra.mxu0 %v120
    %v166 = vpop.f32.mrf.mxu0
    %v167 = vadd.f32 %v42, %v166
    %v168 = vpop.f32.mrf.mxu0
    %v169 = vadd.f32 %v42, %v168
    %170 = vmatmul.bf16.gmra.mxu0 %v123
    %v171 = vpop.f32.mrf.mxu0
    %v172 = vadd.f32 %v42, %v171
    %v173 = vpop.f32.mrf.mxu0
    %v174 = vadd.f32 %v42, %v173
    %175 = vmatmul.bf16.gmra.mxu0 %v126
    %v176 = vpop.f32.mrf.mxu0
    %v177 = vadd.f32 %v42, %v176
    %v178 = vpop.f32.mrf.mxu0
    %v179 = vadd.f32 %v42, %v178
    %180 = vmatmul.bf16.gmra.mxu0 %v129
    %v181 = vpop.f32.mrf.mxu0
    %v182 = vadd.f32 %v42, %v181
    %v183 = vpop.f32.mrf.mxu0
    %v184 = vadd.f32 %v42, %v183
    %185 = vmatmul.bf16.gmra.mxu0 %v132
    %v186 = vpop.f32.mrf.mxu0
    %v187 = vadd.f32 %v42, %v186
    %v188 = vpop.f32.mrf.mxu0
    %v189 = vadd.f32 %v42, %v188
    %190 = vmatmul.bf16.gmra.mxu0 %v135
    %v191 = vpop.f32.mrf.mxu0
    %v192 = vadd.f32 %v42, %v191
    %v193 = vpop.f32.mrf.mxu0
    %v194 = vadd.f32 %v42, %v193
    %195 = vdwg.mxu0
    %v196 = vpack.c.bf16 %v147, %v147
    %v197 = vpack.c.bf16 %v149, %v149
    %v198 = vpack.c.bf16 %v152, %v152
    %v199 = vpack.c.bf16 %v154, %v154
    %v200 = vpack.c.bf16 %v157, %v157
    %v201 = vpack.c.bf16 %v159, %v159
    %v202 = vpack.c.bf16 %v162, %v162
    %v203 = vpack.c.bf16 %v164, %v164
    %v204 = vpack.c.bf16 %v167, %v167
    %v205 = vpack.c.bf16 %v169, %v169
    %v206 = vpack.c.bf16 %v172, %v172
    %v207 = vpack.c.bf16 %v174, %v174
    %v208 = vpack.c.bf16 %v177, %v177
    %v209 = vpack.c.bf16 %v179, %v179
    %v210 = vpack.c.bf16 %v182, %v182
    %v211 = vpack.c.bf16 %v184, %v184
    %v212 = vpack.c.bf16 %v187, %v187
    %v213 = vpack.c.bf16 %v189, %v189
    %v214 = vpack.c.bf16 %v192, %v192
    %v215 = vpack.c.bf16 %v194, %v194
    %216 = vst [vmem:[#allocation2] sm:$0xf] %v196
    %217 = vst [vmem:[#allocation2 + $0x4] sm:$0xf] %v197
    %218 = vst [vmem:[#allocation2 + $0x8] sm:$0xf] %v198
    %219 = vst [vmem:[#allocation2 + $0xc] sm:$0xf] %v199
    %220 = vst [vmem:[#allocation2 + $0x10] sm:$0xf] %v200
    %221 = vst [vmem:[#allocation2 + $0x14] sm:$0xf] %v201
    %222 = vst [vmem:[#allocation2 + $0x18] sm:$0xf] %v202
    %223 = vst [vmem:[#allocation2 + $0x1c] sm:$0xf] %v203
    %224 = vst [vmem:[#allocation2 + $0x20] sm:$0xf] %v204
    %225 = vst [vmem:[#allocation2 + $0x24] sm:$0xf] %v205
    %226 = vst [vmem:[#allocation2 + $0x28] sm:$0xf] %v206
    %227 = vst [vmem:[#allocation2 + $0x2c] sm:$0xf] %v207
    %228 = vst [vmem:[#allocation2 + $0x30] sm:$0xf] %v208
    %229 = vst [vmem:[#allocation2 + $0x34] sm:$0xf] %v209
    %230 = vst [vmem:[#allocation2 + $0x38] sm:$0xf] %v210
    %231 = vst [vmem:[#allocation2 + $0x3c] sm:$0xf] %v211
    %232 = vst [vmem:[#allocation2 + $0x40] sm:$0xf] %v212
    %233 = vst [vmem:[#allocation2 + $0x44] sm:$0xf] %v213
    %234 = vst [vmem:[#allocation2 + $0x48] sm:$0xf] %v214
    %235 = vst [vmem:[#allocation2 + $0x4c] sm:$0xf] %v215
    // Predicated region
    $region14: #{tpu_custom_call.1} parent=1 // pred_check
      _
    $region15: #{tpu_custom_call.1} parent=1 // pred_check_branch
      %237 = sbr.rel (0) target = $region17
    $region16: #{tpu_custom_call.1} parent=1 // pred_region
      %239 = vsyncadd [#allocation3], 0
      %s240 = sshll.u32 [#allocation2], 4
      %s241 = int_to_ptr.vmem [resolvable:$true] %s240
      %s242 = sshll.u32 %s3, 4
      %s243 = int_to_ptr.hbm [resolvable:$true] %s242
      %248 = dma.vmem_to_hbm [thread:$0]  %s241, 1280, %s243, [#allocation3], 64, 64, 4
    $region17: #{tpu_custom_call.1} parent=1 // pred_fallthru
      _
    // Predicated region
    $region18: #{tpu_custom_call.1} parent=1 // pred_check
      _
    $region19: #{tpu_custom_call.1} parent=1 // pred_check_branch
      %250 = sbr.rel (0) target = $region21
    $region20: #{tpu_custom_call.1} parent=1 // pred_region
      %252 = dma.done [#allocation3], 1280
    $region21: #{tpu_custom_call.1} parent=1 // pred_fallthru
      _
    %253 = vsyncpa [#allocation3], 1

</llo_original>
